<compile_context>
chip_gen: v7x
topology: tpu7x:2x2x1
jax: 0.10.0
libtpu: 0.0.40
codegen_flags: <defaults>
</compile_context>

<pallas_src>
import math

import jax
import jax.numpy as jnp
from jax.experimental import pallas as pl
from jax.experimental.pallas import tpu as pltpu


def _round_up(x: int, m: int) -> int:
    return ((x + m - 1) // m) * m


def _packed_linear_sigmoid_kernel(x_ref, w_ref, o_ref):
    # x_ref: (TILE_R, PACK*p)  lane-dense packed rows (PACK logical samples/row)
    # w_ref: (PACK*p, PACK)    block-diagonal replication of the weight (f32, resident)
    # o_ref: (TILE_R, PACK)    f32 outputs, one column per packed logical sample
    x = x_ref[...].astype(jnp.float32)          # upcast in-kernel (native-dtype streaming)
    y = jnp.dot(x, w_ref[...], preferred_element_type=jnp.float32)   # MXU matmul
    o_ref[...] = jax.nn.sigmoid(y).astype(o_ref.dtype)               # exp/recip on EUP


def linear_sigmoid(x: jax.Array, w: jax.Array, *,
                   tile_rows: int = 65536,
                   min_pallas_rows: int | None = None) -> jax.Array:
    """sigmoid(x @ w.T) with x: (N, p), w: (1, p) -> (N, 1)."""
    n, p = x.shape
    assert w.shape == (1, p)
    w = w.astype(jnp.float32)

    # Pack factor: smallest k such that k*p is a multiple of 128 lanes.
    pack = 128 // math.gcd(p, 128)
    pw = pack * p                                   # p=20 -> pack=32, pw=640

    if min_pallas_rows is None:
        min_pallas_rows = 2 * tile_rows             # need >= 2 tiles to beat fused XLA

    n_main = (n // pack) * pack                     # rows handled by the Pallas path
    # Fallback: tiny batches, or feature widths that would need huge packed rows.
    if n_main < max(min_pallas_rows, 16 * pack) or pw > 4096:
        return jax.nn.sigmoid(x.astype(jnp.float32) @ w.T)

    total_r = n_main // pack                        # packed rows

    # Tile sizing: multiple of 8 sublanes; cap so the "parallel" grid axis has
    # >= 2 steps (keeps both v7x TensorCores busy for mid-sized N).
    tile_r = min(max(tile_rows // pack, 8), _round_up(pl.cdiv(total_r, 2), 8))
    tile_r = _round_up(tile_r, 8)
    num_tiles = pl.cdiv(total_r, tile_r)

    # Free row-major repack: 32 logical rows per lane-dense (5*128-lane) VMEM row.
    x_packed = x[:n_main].reshape(total_r, pw)

    # Block-diagonal weight: w_bd[j*p + k, j] = w[0, k]   (built once, ~80 KB)
    w_bd = (jnp.eye(pack, dtype=jnp.float32)[:, None, :]
            * w.reshape(1, p, 1)).reshape(pw, pack)

    # VMEM budget: double-buffered X tile + double-buffered output tile + weight.
    itemsize = jnp.dtype(x.dtype).itemsize
    vmem_need = 2 * tile_r * pw * itemsize + 2 * tile_r * pack * 4 + pw * pack * 4
    vmem_limit = max(32 * 1024 * 1024,
                     min(_round_up(vmem_need + (4 << 20), 1 << 20), 48 * 1024 * 1024))

    out_packed = pl.pallas_call(
        _packed_linear_sigmoid_kernel,
        out_shape=jax.ShapeDtypeStruct((total_r, pack), jnp.float32),
        grid=(num_tiles,),
        in_specs=[
            pl.BlockSpec((tile_r, pw), lambda i: (i, 0)),    # streamed, double-buffered X
            pl.BlockSpec((pw, pack), lambda i: (0, 0)),      # resident block-diag weight
        ],
        out_specs=pl.BlockSpec((tile_r, pack), lambda i: (i, 0)),
        compiler_params=pltpu.CompilerParams(
            dimension_semantics=("parallel",),               # megacore sharding on v7x
            vmem_limit_bytes=vmem_limit,
        ),
        cost_estimate=pl.CostEstimate(
            flops=2 * total_r * pw * pack,
            bytes_accessed=total_r * pw * itemsize + pw * pack * 4 + total_r * pack * 4,
            transcendentals=total_r * pack,
        ),
    )(x_packed, w_bd)

    out_main = out_packed.reshape(n_main, 1)
    if n_main == n:
        return out_main
    # Ragged tail (< pack rows): tiny jnp path, avoids stale-VMEM garbage paths.
    tail = jax.nn.sigmoid(x[n_main:].astype(jnp.float32) @ w.T)
    return jnp.concatenate([out_main, tail], axis=0)


class PallasModel:
    """JAX/Pallas equivalent of the PyTorch Model(p): sigmoid(Linear(p,1,bias=False))."""

    def __init__(self, p: int = 20, key=None):
        if key is None:
            key = jax.random.PRNGKey(0)
        # nn.Linear default init: U(-1/sqrt(p), 1/sqrt(p)); deterministic via PRNGKey.
        bound = 1.0 / math.sqrt(p)
        self.weight = jax.random.uniform(
            key, (1, p), dtype=jnp.float32, minval=-bound, maxval=bound
        )

    def __call__(self, x: jax.Array, **kw) -> jax.Array:
        return linear_sigmoid(x, self.weight, **kw)


if __name__ == "__main__":
    p = 20
    key = jax.random.PRNGKey(0)
    k_x, k_w = jax.random.split(key)
    model = PallasModel(p=p, key=k_w)
    w = model.weight

    # 1) Main Pallas path (small shapes; override tile/threshold to exercise the kernel).
    n = 4096
    x = jax.random.normal(k_x, (n, p), dtype=jnp.float32)
    out = jax.block_until_ready(model(x, tile_rows=1024, min_pallas_rows=1))
    ref = jax.nn.sigmoid(x @ w.T)
    assert out.shape == (n, 1)
    assert jnp.allclose(out, ref, atol=1e-5, rtol=1e-5)

    # 2) Ragged N (not a multiple of the 32-row pack): Pallas main chunk + jnp tail.
    n2 = 1000
    x2 = jax.random.normal(jax.random.PRNGKey(1), (n2, p), dtype=jnp.float32)
    out2 = jax.block_until_ready(linear_sigmoid(x2, w, tile_rows=512, min_pallas_rows=1))
    ref2 = jax.nn.sigmoid(x2 @ w.T)
    assert out2.shape == (n2, 1)
    assert jnp.allclose(out2, ref2, atol=1e-5, rtol=1e-5)

    # 3) Native-dtype streaming (bf16 X upcast inside the kernel, no wrapper copy).
    x3 = jax.random.normal(jax.random.PRNGKey(2), (n, p)).astype(jnp.bfloat16)
    out3 = jax.block_until_ready(linear_sigmoid(x3, w, tile_rows=1024, min_pallas_rows=1))
    ref3 = jax.nn.sigmoid(x3.astype(jnp.float32) @ w.T)
    assert out3.shape == (n, 1)
    assert jnp.allclose(out3, ref3, atol=1e-5, rtol=1e-5)

    # 4) Tiny batch: default thresholds route to the fused XLA fallback.
    x4 = jax.random.normal(jax.random.PRNGKey(3), (8, p), dtype=jnp.float32)
    out4 = jax.block_until_ready(model(x4))
    assert out4.shape == (8, 1)
    assert jnp.allclose(out4, jax.nn.sigmoid(x4 @ w.T), atol=1e-5, rtol=1e-5)

    print("KERNEL_OK")
</pallas_src>

<mosaic_0001>
module attributes {stable_mosaic.version = 11 : i64} {
  func.func @_packed_linear_sigmoid_kernel(%arg0: i32, %arg1: memref<32x640xf32, #tpu.memory_space<vmem>>, %arg2: memref<640x32xf32, #tpu.memory_space<vmem>>, %arg3: memref<32x32xf32, #tpu.memory_space<vmem>>) attributes {dimension_semantics = [#tpu.dimension_semantics<parallel>], iteration_bounds = array<i64: 4>, scalar_prefetch = 0 : i64, scratch_operands = 0 : i64, tpu.core_type = #tpu.core_type<tc>, window_params = [{transform_indices = @transform_0, window_bounds = array<i64: 32, 640>}, {pipeline_mode = #tpu.pipeline_mode<synchronous>, transform_indices = @transform_1, window_bounds = array<i64: 640, 32>}, {transform_indices = @transform_2, window_bounds = array<i64: 32, 32>}]} {
    %c0 = arith.constant 0 : index
    %c0_0 = arith.constant 0 : index
    %0 = vector.load %arg1[%c0, %c0_0] : memref<32x640xf32, #tpu.memory_space<vmem>>, vector<32x640xf32>
    %c0_1 = arith.constant 0 : index
    %c0_2 = arith.constant 0 : index
    %1 = vector.load %arg2[%c0_1, %c0_2] : memref<640x32xf32, #tpu.memory_space<vmem>>, vector<640x32xf32>
    %cst = arith.constant dense<0.000000e+00> : vector<32x32xf32>
    %2 = tpu.matmul %0, %1, %cst {dimension_numbers = #tpu.dot_dimension_numbers<[1], [0], [0], [1], [0, 0, 1, 1], [], []>} : vector<32x640xf32>, vector<640x32xf32>, vector<32x32xf32> -> vector<32x32xf32>
    %3 = arith.negf %2 : vector<32x32xf32>
    %4 = math.exp %3 : vector<32x32xf32>
    %cst_3 = arith.constant 1.000000e+00 : f32
    %5 = vector.broadcast %cst_3 : f32 to vector<32x32xf32>
    %6 = arith.addf %5, %4 : vector<32x32xf32>
    %7 = arith.divf %5, %6 : vector<32x32xf32>
    %c0_4 = arith.constant 0 : index
    %c0_5 = arith.constant 0 : index
    %8 = vector.load %arg3[%c0_4, %c0_5] : memref<32x32xf32, #tpu.memory_space<vmem>>, vector<32x32xf32>
    tpu.vector_store %arg3[%c0_4, %c0_5], %7 {strides = array<i32>} : memref<32x32xf32, #tpu.memory_space<vmem>>, vector<32x32xf32>,
    return
  }
  func.func @transform_0(%arg0: i32) -> (i32, i32) {
    %c0_i32 = arith.constant 0 : i32
    %c0_i32_0 = arith.constant 0 : i32
    return %arg0, %c0_i32 : i32, i32
  }
  func.func @transform_1(%arg0: i32) -> (i32, i32) {
    %c0_i32 = arith.constant 0 : i32
    %c0_i32_0 = arith.constant 0 : i32
    %c0_i32_1 = arith.constant 0 : i32
    return %c0_i32, %c0_i32_0 : i32, i32
  }
  func.func @transform_2(%arg0: i32) -> (i32, i32) {
    %c0_i32 = arith.constant 0 : i32
    %c0_i32_0 = arith.constant 0 : i32
    return %arg0, %c0_i32 : i32, i32
  }
}

</mosaic_0001>

<llo_original>
// kernel: tpu_custom_call.1
$region0: #{tpu_custom_call.1}
  #allocation0 [shape = 'u32[]', space=smem, size = 0x4, offset = 0x4, fixed_abs, tag = 'smem constant byte address 0x4 - core index']
  #allocation1 [shape = 'u32[144,128]{1,0:T(1,128)}', space=vmem, size = 0x12000, scoped, tag = 'internal scratch']
  %s0 = inlined_call_operand.vmem [shape: f32[128,640], index: 0, kind: input, shape index: {}]
  %s1 = inlined_call_operand.vmem [shape: f32[640,32], index: 1, kind: input, shape index: {}]
  %s2 = inlined_call_operand.vmem [shape: f32[128,32], index: 2, kind: output, shape index: {}]
  %s3 = sld [smem:[#allocation0]]
  $region41: #{tpu_custom_call.1} parent=0
    _
  %s5 = ssub.s32 1, %s3
  %s6 = scalar_select 0, %s5, %s3
  loop: start=0, step=1, limit=6
  $region2: #{tpu_custom_call.1} parent=0 // loop_pre_header
    _
  $region3: #{tpu_custom_call.1} parent=0 // loop_header
    %s8 = sphi 0, %s12
    %p9 = scmp.ge.s32.totalorder %s8, 6
    %s18 = sphi 0, %s20
    %s21 = sphi 0, %s18
    %s22 = sphi 0, %s21
    %s38 = sphi 0, %s22
    %s42 = sphi 0, %s42
    %s44 = sphi 0, %s42
    %s45 = sphi 0, %s44
    %s59 = sphi 0, %s45
    %s65 = sphi 0, %s67
    %s68 = sphi 0, %s65
    %s69 = sphi 0, %s68
    %s85 = sphi 0, %s69
  $region4: #{tpu_custom_call.1} parent=0 // loop_header_branch
    %11 = sbr.rel (%p9) target = $region8
  $region5: #{tpu_custom_call.1} parent=0 // loop_body
    %s13 = ssub.s32 %s8, 1
    %s14 = ssub.s32 %s8, 2
    %s15 = sadd.s32 %s8, 1
    %s16 = ssub.s32 %s8, %s15
    %p17 = scmp.eq.s32.totalorder %s16, 0
    %s19 = sadd.s32 %s18, 1
    %s20 = scalar_select %p17, %s18, %s19
    %p23 = pneg %p17
    %p24 = scmp.eq.s32.totalorder %s8, 3
    %p25 = por %p23, %p24
    %p26 = scmp.ne.s32.totalorder %s18, %s21
    %p27 = scmp.eq.s32.totalorder %s8, 0
    %p28 = por %p26, %p27
    %p29 = scmp.ne.s32.totalorder %s18, %s21
    %p30 = scmp.eq.s32.totalorder %s13, 3
    %p31 = por %p29, %p30
    %p32 = scmp.ne.s32.totalorder %s21, %s22
    %p33 = scmp.eq.s32.totalorder %s13, 0
    %p34 = por %p32, %p33
    %p35 = scmp.ne.s32.totalorder %s21, %s22
    %p36 = scmp.eq.s32.totalorder %s14, 3
    %p37 = por %p35, %p36
    %p39 = scmp.ne.s32.totalorder %s22, %s38
    %p40 = scmp.eq.s32.totalorder %s14, 0
    %p41 = por %p39, %p40
    %s43 = sadd.s32 %s42, 1
    %p46 = scmp.eq.s32.totalorder %s8, 3
    %p47 = scmp.ne.s32.totalorder %s42, %s44
    %p48 = scmp.eq.s32.totalorder %s8, 0
    %p49 = por %p47, %p48
    %p50 = scmp.ne.s32.totalorder %s42, %s44
    %p51 = scmp.eq.s32.totalorder %s13, 3
    %p52 = por %p50, %p51
    %p53 = scmp.ne.s32.totalorder %s44, %s45
    %p54 = scmp.eq.s32.totalorder %s13, 0
    %p55 = por %p53, %p54
    %p56 = scmp.ne.s32.totalorder %s44, %s45
    %p57 = scmp.eq.s32.totalorder %s14, 3
    %p58 = por %p56, %p57
    %p60 = scmp.ne.s32.totalorder %s45, %s59
    %p61 = scmp.eq.s32.totalorder %s14, 0
    %p62 = por %p60, %p61
    %s63 = ssub.s32 %s8, %s15
    %p64 = scmp.eq.s32.totalorder %s63, 0
    %s66 = sadd.s32 %s65, 1
    %s67 = scalar_select %p64, %s65, %s66
    %p70 = pneg %p64
    %p71 = scmp.eq.s32.totalorder %s8, 3
    %p72 = por %p70, %p71
    %p73 = scmp.ne.s32.totalorder %s65, %s68
    %p74 = scmp.eq.s32.totalorder %s8, 0
    %p75 = por %p73, %p74
    %p76 = scmp.ne.s32.totalorder %s65, %s68
    %p77 = scmp.eq.s32.totalorder %s13, 3
    %p78 = por %p76, %p77
    %p79 = scmp.ne.s32.totalorder %s68, %s69
    %p80 = scmp.eq.s32.totalorder %s13, 0
    %p81 = por %p79, %p80
    %p82 = scmp.ne.s32.totalorder %s68, %s69
    %p83 = scmp.eq.s32.totalorder %s14, 3
    %p84 = por %p82, %p83
    %p86 = scmp.ne.s32.totalorder %s69, %s85
    %p87 = scmp.eq.s32.totalorder %s14, 0
    %p88 = por %p86, %p87
    %p89 = scmp.le.s32.totalorder 1, %s8
    %p90 = scmp.lt.s32.totalorder %s8, 5
    %p91 = pnand %p89, %p90
    %p92 = pneg %p91
    // Predicated region
    $region9: #{tpu_custom_call.1} parent=5 // pred_check
      _
    $region10: #{tpu_custom_call.1} parent=5 // pred_check_branch
      %94 = sbr.rel (%p91) target = $region12
    $region11: #{tpu_custom_call.1} parent=5 // pred_region
      %s95 = ssub.s32 %s8, 1
      // Predicated region
      $region13: #{tpu_custom_call.1} parent=11 // pred_check
        %p96 = pneg %p55
      $region14: #{tpu_custom_call.1} parent=11 // pred_check_branch
        %98 = sbr.rel (%p96) target = $region16
      $region15: #{tpu_custom_call.1} parent=11 // pred_region
        _
      $region16: #{tpu_custom_call.1} parent=11 // pred_fallthru
        _
    $region12: #{tpu_custom_call.1} parent=5 // pred_fallthru
      _
    %p99 = scmp.lt.s32.totalorder %s8, 4
    // Predicated region
    $region17: #{tpu_custom_call.1} parent=5 // pred_check
      %p100 = pneg %p99
    $region18: #{tpu_custom_call.1} parent=5 // pred_check_branch
      %102 = sbr.rel (%p100) target = $region20
    $region19: #{tpu_custom_call.1} parent=5 // pred_region
      // Predicated region
      $region21: #{tpu_custom_call.1} parent=19 // pred_check
        %p103 = pneg %p28
      $region22: #{tpu_custom_call.1} parent=19 // pred_check_branch
        %105 = sbr.rel (%p103) target = $region24
      $region23: #{tpu_custom_call.1} parent=19 // pred_region
        %s106 = smul.u32 4, %s8
        %p107 = scmp.lt.s32.totalorder %s106, 15
        %s108 = scalar_select %p107, %s106, 15
        %s109 = smul.addr %s108, 5
        %s110 = smul.addr %s109, 8
        %s111 = scalar_lea.vmem %s0, %s110
        %s112 = smul.u32 4, %s8
      $region24: #{tpu_custom_call.1} parent=19 // pred_fallthru
        _
    $region20: #{tpu_custom_call.1} parent=5 // pred_fallthru
      _
    %p113 = scmp.le.s32.totalorder 1, %s8
    %p114 = scmp.lt.s32.totalorder %s8, 5
    %p115 = pnand %p113, %p114
    %p116 = pneg %p115
    // Predicated region
    $region25: #{tpu_custom_call.1} parent=5 // pred_check
      _
    $region26: #{tpu_custom_call.1} parent=5 // pred_check_branch
      %118 = sbr.rel (%p115) target = $region28
    $region27: #{tpu_custom_call.1} parent=5 // pred_region
      %s119 = ssub.s32 %s8, 1
      %s120 = smul.u32 4, %s13
      %p121 = scmp.lt.s32.totalorder %s120, 15
      %s122 = scalar_select %p121, %s120, 15
      %s123 = smul.addr %s122, 5
      %s124 = smul.addr %s123, 8
      %s125 = scalar_lea.vmem %s0, %s124
      %p126 = pneg %p34
      %p127 = pneg %p31
      %p128 = pneg %p55
      %p129 = pneg %p52
      %p130 = pneg %p81
      %p131 = pneg %p78
      %s132 = smul.u32 4, %s13
      %p133 = scmp.lt.s32.totalorder %s132, 15
      %s134 = scalar_select %p133, %s132, 15
      %s135 = smul.addr %s134, 8
      %s136 = scalar_lea.vmem %s2, %s135
      %s137 = smul.u32 4, %s13
      %p138 = scmp.lt.s32.totalorder %s137, 15
      %s139 = scalar_select %p138, %s137, 15
      %s140 = smul.addr %s139, 5
      %s141 = smul.addr %s140, 8
      %s142 = scalar_lea.vmem %s0, %s141
      %s143 = smul.u32 4, %s13
      %s144 = smul.u32 4, %s13
      %p145 = scmp.lt.s32.totalorder %s144, 15
      %s146 = scalar_select %p145, %s144, 15
      %s147 = smul.addr %s146, 8
      %s148 = scalar_lea.vmem %s2, %s147
      %s149 = smul.u32 4, %s13
      %v150 = vld [vmem:[%s142] sm:$0xff]
      %v151 = vld [vmem:[%s142 + $0x8] sm:$0xff]
      %v152 = vld [vmem:[%s142 + $0x10] sm:$0xff]
      %v153 = vld [vmem:[%s142 + $0x18] sm:$0xff]
      %v154 = vld [vmem:[%s142 + $0x20] sm:$0xff]
      %v155 = vld [vmem:[%s142 + $0x28] sm:$0xff]
      %v156 = vld [vmem:[%s142 + $0x30] sm:$0xff]
      %v157 = vld [vmem:[%s142 + $0x38] sm:$0xff]
      %v158 = vld [vmem:[%s142 + $0x40] sm:$0xff]
      %v159 = vld [vmem:[%s142 + $0x48] sm:$0xff]
      %v160 = vld [vmem:[%s142 + $0x50] sm:$0xff]
      %v161 = vld [vmem:[%s142 + $0x58] sm:$0xff]
      %v162 = vld [vmem:[%s142 + $0x60] sm:$0xff]
      %v163 = vld [vmem:[%s142 + $0x68] sm:$0xff]
      %v164 = vld [vmem:[%s142 + $0x70] sm:$0xff]
      %v165 = vld [vmem:[%s142 + $0x78] sm:$0xff]
      %v166 = vld [vmem:[%s142 + $0x80] sm:$0xff]
      %v167 = vld [vmem:[%s142 + $0x88] sm:$0xff]
      %v168 = vld [vmem:[%s142 + $0x90] sm:$0xff]
      %v169 = vld [vmem:[%s142 + $0x98] sm:$0xff]
      %v170 = vld [vmem:[%s1] sm:$0xff]
      %v171 = vld [vmem:[%s1 + $0x8] sm:$0xff]
      %v172 = vld [vmem:[%s1 + $0x10] sm:$0xff]
      %v173 = vld [vmem:[%s1 + $0x18] sm:$0xff]
      %v174 = vld [vmem:[%s1 + $0x20] sm:$0xff]
      %v175 = vld [vmem:[%s1 + $0x28] sm:$0xff]
      %v176 = vld [vmem:[%s1 + $0x30] sm:$0xff]
      %v177 = vld [vmem:[%s1 + $0x38] sm:$0xff]
      %v178 = vld [vmem:[%s1 + $0x40] sm:$0xff]
      %v179 = vld [vmem:[%s1 + $0x48] sm:$0xff]
      %v180 = vld [vmem:[%s1 + $0x50] sm:$0xff]
      %v181 = vld [vmem:[%s1 + $0x58] sm:$0xff]
      %v182 = vld [vmem:[%s1 + $0x60] sm:$0xff]
      %v183 = vld [vmem:[%s1 + $0x68] sm:$0xff]
      %v184 = vld [vmem:[%s1 + $0x70] sm:$0xff]
      %v185 = vld [vmem:[%s1 + $0x78] sm:$0xff]
      %v186 = vld [vmem:[%s1 + $0x80] sm:$0xff]
      %v187 = vld [vmem:[%s1 + $0x88] sm:$0xff]
      %v188 = vld [vmem:[%s1 + $0x90] sm:$0xff]
      %v189 = vld [vmem:[%s1 + $0x98] sm:$0xff]
      %v190 = vld [vmem:[%s1 + $0xa0] sm:$0xff]
      %v191 = vld [vmem:[%s1 + $0xa8] sm:$0xff]
      %v192 = vld [vmem:[%s1 + $0xb0] sm:$0xff]
      %v193 = vld [vmem:[%s1 + $0xb8] sm:$0xff]
      %v194 = vld [vmem:[%s1 + $0xc0] sm:$0xff]
      %v195 = vld [vmem:[%s1 + $0xc8] sm:$0xff]
      %v196 = vld [vmem:[%s1 + $0xd0] sm:$0xff]
      %v197 = vld [vmem:[%s1 + $0xd8] sm:$0xff]
      %v198 = vld [vmem:[%s1 + $0xe0] sm:$0xff]
      %v199 = vld [vmem:[%s1 + $0xe8] sm:$0xff]
      %v200 = vld [vmem:[%s1 + $0xf0] sm:$0xff]
      %v201 = vld [vmem:[%s1 + $0xf8] sm:$0xff]
      %v202 = vld [vmem:[%s1 + $0x100] sm:$0xff]
      %v203 = vld [vmem:[%s1 + $0x108] sm:$0xff]
      %v204 = vld [vmem:[%s1 + $0x110] sm:$0xff]
      %v205 = vld [vmem:[%s1 + $0x118] sm:$0xff]
      %v206 = vld [vmem:[%s1 + $0x120] sm:$0xff]
      %v207 = vld [vmem:[%s1 + $0x128] sm:$0xff]
      %v208 = vld [vmem:[%s1 + $0x130] sm:$0xff]
      %v209 = vld [vmem:[%s1 + $0x138] sm:$0xff]
      %v210 = vld [vmem:[%s1 + $0x140] sm:$0xff]
      %v211 = vld [vmem:[%s1 + $0x148] sm:$0xff]
      %v212 = vld [vmem:[%s1 + $0x150] sm:$0xff]
      %v213 = vld [vmem:[%s1 + $0x158] sm:$0xff]
      %v214 = vld [vmem:[%s1 + $0x160] sm:$0xff]
      %v215 = vld [vmem:[%s1 + $0x168] sm:$0xff]
      %v216 = vld [vmem:[%s1 + $0x170] sm:$0xff]
      %v217 = vld [vmem:[%s1 + $0x178] sm:$0xff]
      %v218 = vld [vmem:[%s1 + $0x180] sm:$0xff]
      %v219 = vld [vmem:[%s1 + $0x188] sm:$0xff]
      %v220 = vld [vmem:[%s1 + $0x190] sm:$0xff]
      %v221 = vld [vmem:[%s1 + $0x198] sm:$0xff]
      %v222 = vld [vmem:[%s1 + $0x1a0] sm:$0xff]
      %v223 = vld [vmem:[%s1 + $0x1a8] sm:$0xff]
      %v224 = vld [vmem:[%s1 + $0x1b0] sm:$0xff]
      %v225 = vld [vmem:[%s1 + $0x1b8] sm:$0xff]
      %v226 = vld [vmem:[%s1 + $0x1c0] sm:$0xff]
      %v227 = vld [vmem:[%s1 + $0x1c8] sm:$0xff]
      %v228 = vld [vmem:[%s1 + $0x1d0] sm:$0xff]
      %v229 = vld [vmem:[%s1 + $0x1d8] sm:$0xff]
      %v230 = vld [vmem:[%s1 + $0x1e0] sm:$0xff]
      %v231 = vld [vmem:[%s1 + $0x1e8] sm:$0xff]
      %v232 = vld [vmem:[%s1 + $0x1f0] sm:$0xff]
      %v233 = vld [vmem:[%s1 + $0x1f8] sm:$0xff]
      %v234 = vld [vmem:[%s1 + $0x200] sm:$0xff]
      %v235 = vld [vmem:[%s1 + $0x208] sm:$0xff]
      %v236 = vld [vmem:[%s1 + $0x210] sm:$0xff]
      %v237 = vld [vmem:[%s1 + $0x218] sm:$0xff]
      %v238 = vld [vmem:[%s1 + $0x220] sm:$0xff]
      %v239 = vld [vmem:[%s1 + $0x228] sm:$0xff]
      %v240 = vld [vmem:[%s1 + $0x230] sm:$0xff]
      %v241 = vld [vmem:[%s1 + $0x238] sm:$0xff]
      %v242 = vld [vmem:[%s1 + $0x240] sm:$0xff]
      %v243 = vld [vmem:[%s1 + $0x248] sm:$0xff]
      %v244 = vld [vmem:[%s1 + $0x250] sm:$0xff]
      %v245 = vld [vmem:[%s1 + $0x258] sm:$0xff]
      %v246 = vld [vmem:[%s1 + $0x260] sm:$0xff]
      %v247 = vld [vmem:[%s1 + $0x268] sm:$0xff]
      %v248 = vld [vmem:[%s1 + $0x270] sm:$0xff]
      %v249 = vld [vmem:[%s1 + $0x278] sm:$0xff]
      %250 = vmatprep.subr.mxu0 0.0
      %251 = vmatpush1.msra.mxu0 %v170
      %252 = vmatprep.subr.mxu0 0.0
      %253 = vmatpush1.msra.mxu0 %v171
      %254 = vmatprep.subr.mxu0 0.0
      %255 = vmatpush1.msra.mxu0 %v172
      %256 = vmatprep.subr.mxu0 0.0
      %257 = vmatpush1.msra.mxu0 %v173
      %258 = vmatprep.subr.mxu0 0.0
      %259 = vmatpush1.msra.mxu0 %v174
      %260 = vmatprep.subr.mxu0 0.0
      %261 = vmatpush1.msra.mxu0 %v175
      %262 = vmatprep.subr.mxu0 0.0
      %263 = vmatpush1.msra.mxu0 %v176
      %264 = vmatprep.subr.mxu0 0.0
      %265 = vmatpush1.msra.mxu0 %v177
      %266 = vmatprep.subr.mxu0 0.0
      %267 = vmatpush1.msra.mxu0 %v178
      %268 = vmatprep.subr.mxu0 0.0
      %269 = vmatpush1.msra.mxu0 %v179
      %270 = vmatprep.subr.mxu0 0.0
      %271 = vmatpush1.msra.mxu0 %v180
      %272 = vmatprep.subr.mxu0 0.0
      %273 = vmatpush1.msra.mxu0 %v181
      %274 = vmatprep.subr.mxu0 0.0
      %275 = vmatpush1.msra.mxu0 %v182
      %276 = vmatprep.subr.mxu0 0.0
      %277 = vmatpush1.msra.mxu0 %v183
      %278 = vmatprep.subr.mxu0 0.0
      %279 = vmatpush1.msra.mxu0 %v184
      %280 = vmatprep.subr.mxu0 0.0
      %281 = vmatpush1.msra.mxu0 %v185
      %282 = vmatprep.subr.mxu0 0.0
      %283 = vmatpush1.msra.mxu0 %v186
      %284 = vmatprep.subr.mxu0 0.0
      %285 = vmatpush1.msra.mxu0 %v187
      %286 = vmatprep.subr.mxu0 0.0
      %287 = vmatpush1.msra.mxu0 %v188
      %288 = vmatprep.subr.mxu0 0.0
      %289 = vmatpush1.msra.mxu0 %v189
      %290 = vmatprep.subr.mxu0 0.0
      %291 = vmatpush1.msra.mxu0 %v190
      %292 = vmatprep.subr.mxu0 0.0
      %293 = vmatpush1.msra.mxu0 %v191
      %294 = vmatprep.subr.mxu0 0.0
      %295 = vmatpush1.msra.mxu0 %v192
      %296 = vmatprep.subr.mxu0 0.0
      %297 = vmatpush1.msra.mxu0 %v193
      %298 = vmatprep.subr.mxu0 0.0
      %299 = vmatpush1.msra.mxu0 %v194
      %300 = vmatprep.subr.mxu0 0.0
      %301 = vmatpush1.msra.mxu0 %v195
      %302 = vmatprep.subr.mxu0 0.0
      %303 = vmatpush1.msra.mxu0 %v196
      %304 = vmatprep.subr.mxu0 0.0
      %305 = vmatpush1.msra.mxu0 %v197
      %306 = vmatprep.subr.mxu0 0.0
      %307 = vmatpush1.msra.mxu0 %v198
      %308 = vmatprep.subr.mxu0 0.0
      %309 = vmatpush1.msra.mxu0 %v199
      %310 = vmatprep.subr.mxu0 0.0
      %311 = vmatpush1.msra.mxu0 %v200
      %312 = vmatprep.subr.mxu0 0.0
      %313 = vmatpush1.msra.mxu0 %v201
      %314 = vmatprep.mubr.f32.mxu0 %v151
      %315 = vmatmul.mubr.f32.gmra.mrb[0].mxu0 %v150
      %v316 = vpop.f32.mrb[0].mxu0
      %v317 = vadd.f32 0.0, %v316
      %v318 = vpop.f32.mrb[0].mxu0
      %319 = vmatprep.mubr.f32.mxu0 %v156
      %320 = vmatmul.mubr.f32.gmra.mrb[0].mxu0 %v155
      %v321 = vpop.f32.mrb[0].mxu0
      %v322 = vadd.f32 0.0, %v321
      %v323 = vpop.f32.mrb[0].mxu0
      %324 = vmatprep.mubr.f32.mxu0 %v161
      %325 = vmatmul.mubr.f32.gmra.mrb[0].mxu0 %v160
      %v326 = vpop.f32.mrb[0].mxu0
      %v327 = vadd.f32 0.0, %v326
      %v328 = vpop.f32.mrb[0].mxu0
      %329 = vmatprep.mubr.f32.mxu0 %v166
      %330 = vmatmul.mubr.f32.gmra.mrb[0].mxu0 %v165
      %v331 = vpop.f32.mrb[0].mxu0
      %v332 = vadd.f32 0.0, %v331
      %v333 = vpop.f32.mrb[0].mxu0
      %334 = vdwg.mxu0
      %335 = vmatprep.subr.mxu0 0.0
      %336 = vmatpush1.msra.mxu0 %v202
      %337 = vmatprep.subr.mxu0 0.0
      %338 = vmatpush1.msra.mxu0 %v203
      %339 = vmatprep.subr.mxu0 0.0
      %340 = vmatpush1.msra.mxu0 %v204
      %341 = vmatprep.subr.mxu0 0.0
      %342 = vmatpush1.msra.mxu0 %v205
      %343 = vmatprep.subr.mxu0 0.0
      %344 = vmatpush1.msra.mxu0 %v206
      %345 = vmatprep.subr.mxu0 0.0
      %346 = vmatpush1.msra.mxu0 %v207
      %347 = vmatprep.subr.mxu0 0.0
      %348 = vmatpush1.msra.mxu0 %v208
      %349 = vmatprep.subr.mxu0 0.0
      %350 = vmatpush1.msra.mxu0 %v209
      %351 = vmatprep.subr.mxu0 0.0
      %352 = vmatpush1.msra.mxu0 %v210
      %353 = vmatprep.subr.mxu0 0.0
      %354 = vmatpush1.msra.mxu0 %v211
      %355 = vmatprep.subr.mxu0 0.0
      %356 = vmatpush1.msra.mxu0 %v212
      %357 = vmatprep.subr.mxu0 0.0
      %358 = vmatpush1.msra.mxu0 %v213
      %359 = vmatprep.subr.mxu0 0.0
      %360 = vmatpush1.msra.mxu0 %v214
      %361 = vmatprep.subr.mxu0 0.0
      %362 = vmatpush1.msra.mxu0 %v215
      %363 = vmatprep.subr.mxu0 0.0
      %364 = vmatpush1.msra.mxu0 %v216
      %365 = vmatprep.subr.mxu0 0.0
      %366 = vmatpush1.msra.mxu0 %v217
      %367 = vmatprep.subr.mxu0 0.0
      %368 = vmatpush1.msra.mxu0 %v218
      %369 = vmatprep.subr.mxu0 0.0
      %370 = vmatpush1.msra.mxu0 %v219
      %371 = vmatprep.subr.mxu0 0.0
      %372 = vmatpush1.msra.mxu0 %v220
      %373 = vmatprep.subr.mxu0 0.0
      %374 = vmatpush1.msra.mxu0 %v221
      %375 = vmatprep.subr.mxu0 0.0
      %376 = vmatpush1.msra.mxu0 %v222
      %377 = vmatprep.subr.mxu0 0.0
      %378 = vmatpush1.msra.mxu0 %v223
      %379 = vmatprep.subr.mxu0 0.0
      %380 = vmatpush1.msra.mxu0 %v224
      %381 = vmatprep.subr.mxu0 0.0
      %382 = vmatpush1.msra.mxu0 %v225
      %383 = vmatprep.subr.mxu0 0.0
      %384 = vmatpush1.msra.mxu0 %v226
      %385 = vmatprep.subr.mxu0 0.0
      %386 = vmatpush1.msra.mxu0 %v227
      %387 = vmatprep.subr.mxu0 0.0
      %388 = vmatpush1.msra.mxu0 %v228
      %389 = vmatprep.subr.mxu0 0.0
      %390 = vmatpush1.msra.mxu0 %v229
      %391 = vmatprep.subr.mxu0 0.0
      %392 = vmatpush1.msra.mxu0 %v230
      %393 = vmatprep.subr.mxu0 0.0
      %394 = vmatpush1.msra.mxu0 %v231
      %395 = vmatprep.subr.mxu0 0.0
      %396 = vmatpush1.msra.mxu0 %v232
      %397 = vmatprep.subr.mxu0 0.0
      %398 = vmatpush1.msra.mxu0 %v233
      %399 = vmatprep.mubr.f32.mxu0 %v153
      %400 = vmatmul.mubr.f32.gmra.mrb[0].mxu0 %v152
      %v401 = vpop.f32.mrb[0].mxu0
      %v402 = vadd.f32 %v317, %v401
      %v403 = vpop.f32.mrb[0].mxu0
      %404 = vmatprep.mubr.f32.mxu0 %v158
      %405 = vmatmul.mubr.f32.gmra.mrb[0].mxu0 %v157
      %v406 = vpop.f32.mrb[0].mxu0
      %v407 = vadd.f32 %v322, %v406
      %v408 = vpop.f32.mrb[0].mxu0
      %409 = vmatprep.mubr.f32.mxu0 %v163
      %410 = vmatmul.mubr.f32.gmra.mrb[0].mxu0 %v162
      %v411 = vpop.f32.mrb[0].mxu0
      %v412 = vadd.f32 %v327, %v411
      %v413 = vpop.f32.mrb[0].mxu0
      %414 = vmatprep.mubr.f32.mxu0 %v168
      %415 = vmatmul.mubr.f32.gmra.mrb[0].mxu0 %v167
      %v416 = vpop.f32.mrb[0].mxu0
      %v417 = vadd.f32 %v332, %v416
      %v418 = vpop.f32.mrb[0].mxu0
      %419 = vdwg.mxu0
      %420 = vmatprep.subr.mxu0 0.0
      %421 = vmatpush1.msra.mxu0 %v234
      %422 = vmatprep.subr.mxu0 0.0
      %423 = vmatpush1.msra.mxu0 %v235
      %424 = vmatprep.subr.mxu0 0.0
      %425 = vmatpush1.msra.mxu0 %v236
      %426 = vmatprep.subr.mxu0 0.0
      %427 = vmatpush1.msra.mxu0 %v237
      %428 = vmatprep.subr.mxu0 0.0
      %429 = vmatpush1.msra.mxu0 %v238
      %430 = vmatprep.subr.mxu0 0.0
      %431 = vmatpush1.msra.mxu0 %v239
      %432 = vmatprep.subr.mxu0 0.0
      %433 = vmatpush1.msra.mxu0 %v240
      %434 = vmatprep.subr.mxu0 0.0
      %435 = vmatpush1.msra.mxu0 %v241
      %436 = vmatprep.subr.mxu0 0.0
      %437 = vmatpush1.msra.mxu0 %v242
      %438 = vmatprep.subr.mxu0 0.0
      %439 = vmatpush1.msra.mxu0 %v243
      %440 = vmatprep.subr.mxu0 0.0
      %441 = vmatpush1.msra.mxu0 %v244
      %442 = vmatprep.subr.mxu0 0.0
      %443 = vmatpush1.msra.mxu0 %v245
      %444 = vmatprep.subr.mxu0 0.0
      %445 = vmatpush1.msra.mxu0 %v246
      %446 = vmatprep.subr.mxu0 0.0
      %447 = vmatpush1.msra.mxu0 %v247
      %448 = vmatprep.subr.mxu0 0.0
      %449 = vmatpush1.msra.mxu0 %v248
      %450 = vmatprep.subr.mxu0 0.0
      %451 = vmatpush1.msra.mxu0 %v249
      %452 = vmatprep.subr.mxu0 0.0
      %453 = vmatpush1.msra.mxu0 0.0
      %454 = vmatprep.subr.mxu0 0.0
      %455 = vmatpush1.msra.mxu0 0.0
      %456 = vmatprep.subr.mxu0 0.0
      %457 = vmatpush1.msra.mxu0 0.0
      %458 = vmatprep.subr.mxu0 0.0
      %459 = vmatpush1.msra.mxu0 0.0
      %460 = vmatprep.subr.mxu0 0.0
      %461 = vmatpush1.msra.mxu0 0.0
      %462 = vmatprep.subr.mxu0 0.0
      %463 = vmatpush1.msra.mxu0 0.0
      %464 = vmatprep.subr.mxu0 0.0
      %465 = vmatpush1.msra.mxu0 0.0
      %466 = vmatprep.subr.mxu0 0.0
      %467 = vmatpush1.msra.mxu0 0.0
      %468 = vmatprep.subr.mxu0 0.0
      %469 = vmatpush1.msra.mxu0 0.0
      %470 = vmatprep.subr.mxu0 0.0
      %471 = vmatpush1.msra.mxu0 0.0
      %472 = vmatprep.subr.mxu0 0.0
      %473 = vmatpush1.msra.mxu0 0.0
      %474 = vmatprep.subr.mxu0 0.0
      %475 = vmatpush1.msra.mxu0 0.0
      %476 = vmatprep.subr.mxu0 0.0
      %477 = vmatpush1.msra.mxu0 0.0
      %478 = vmatprep.subr.mxu0 0.0
      %479 = vmatpush1.msra.mxu0 0.0
      %480 = vmatprep.subr.mxu0 0.0
      %481 = vmatpush1.msra.mxu0 0.0
      %482 = vmatprep.subr.mxu0 0.0
      %483 = vmatpush1.msra.mxu0 0.0
      %484 = vmatprep.mubr.f32.mxu0 0.0
      %485 = vmatmul.mubr.f32.gmra.mrb[0].mxu0 %v154
      %v486 = vpop.f32.mrb[0].mxu0
      %v487 = vadd.f32 %v402, %v486
      %v488 = vpop.f32.mrb[0].mxu0
      %489 = vmatprep.mubr.f32.mxu0 0.0
      %490 = vmatmul.mubr.f32.gmra.mrb[0].mxu0 %v159
      %v491 = vpop.f32.mrb[0].mxu0
      %v492 = vadd.f32 %v407, %v491
      %v493 = vpop.f32.mrb[0].mxu0
      %494 = vmatprep.mubr.f32.mxu0 0.0
      %495 = vmatmul.mubr.f32.gmra.mrb[0].mxu0 %v164
      %v496 = vpop.f32.mrb[0].mxu0
      %v497 = vadd.f32 %v412, %v496
      %v498 = vpop.f32.mrb[0].mxu0
      %499 = vmatprep.mubr.f32.mxu0 0.0
      %500 = vmatmul.mubr.f32.gmra.mrb[0].mxu0 %v169
      %v501 = vpop.f32.mrb[0].mxu0
      %v502 = vadd.f32 %v417, %v501
      %v503 = vpop.f32.mrb[0].mxu0
      %504 = vdwg.mxu0
      %v505 = vxor.u32 %v487, 2147483648
      %v506 = vxor.u32 %v492, 2147483648
      %v507 = vxor.u32 %v497, 2147483648
      %v508 = vxor.u32 %v502, 2147483648
      %v509 = vmul.f32 %v505, 1.442695
      %v510 = vpow.pop %v509
      %v511 = vmul.f32 %v506, 1.442695
      %v512 = vpow.pop %v511
      %v513 = vmul.f32 %v507, 1.442695
      %v514 = vpow.pop %v513
      %v515 = vmul.f32 %v508, 1.442695
      %v516 = vpow.pop %v515
      %v517 = vadd.f32 %v510, 1.0
      %v518 = vadd.f32 %v512, 1.0
      %v519 = vadd.f32 %v514, 1.0
      %v520 = vadd.f32 %v516, 1.0
      %v521 = vrcp.pop %v517
      %v522 = vmul.f32 1.0, %v521
      %v523 = vrcp.pop %v518
      %v524 = vmul.f32 1.0, %v523
      %v525 = vrcp.pop %v519
      %v526 = vmul.f32 1.0, %v525
      %v527 = vrcp.pop %v520
      %v528 = vmul.f32 1.0, %v527
      %vm529 = vcmask 261120
      %530 = vst.msk [vmem:[%s148] sm:$0xff] %vm529, %v522
      %531 = vst.msk [vmem:[%s148 + $0x8] sm:$0xff] %vm529, %v524
      %532 = vst.msk [vmem:[%s148 + $0x10] sm:$0xff] %vm529, %v526
      %533 = vst.msk [vmem:[%s148 + $0x18] sm:$0xff] %vm529, %v528
      %s534 = smul.u32 4, %s13
      %p535 = scmp.lt.s32.totalorder %s534, 15
      %s536 = scalar_select %p535, %s534, 15
      %s537 = smul.addr %s536, 8
      %s538 = scalar_lea.vmem %s2, %s537
      // Predicated region
      $region29: #{tpu_custom_call.1} parent=27 // pred_check
        %p539 = pneg %p78
      $region30: #{tpu_custom_call.1} parent=27 // pred_check_branch
        %541 = sbr.rel (%p539) target = $region32
      $region31: #{tpu_custom_call.1} parent=27 // pred_region
        %s542 = smul.u32 4, %s13
      $region32: #{tpu_custom_call.1} parent=27 // pred_fallthru
        _
    $region28: #{tpu_custom_call.1} parent=5 // pred_fallthru
      _
    %p543 = scmp.le.s32.totalorder 2, %s8
    // Predicated region
    $region33: #{tpu_custom_call.1} parent=5 // pred_check
      %p544 = pneg %p543
    $region34: #{tpu_custom_call.1} parent=5 // pred_check_branch
      %546 = sbr.rel (%p544) target = $region36
    $region35: #{tpu_custom_call.1} parent=5 // pred_region
      %s547 = ssub.s32 %s8, 2
      // Predicated region
      $region37: #{tpu_custom_call.1} parent=35 // pred_check
        %p548 = pneg %p84
      $region38: #{tpu_custom_call.1} parent=35 // pred_check_branch
        %550 = sbr.rel (%p548) target = $region40
      $region39: #{tpu_custom_call.1} parent=35 // pred_region
        %s551 = smul.u32 4, %s14
        %p552 = scmp.lt.s32.totalorder %s551, 15
        %s553 = scalar_select %p552, %s551, 15
        %s554 = smul.addr %s553, 8
        %s555 = scalar_lea.vmem %s2, %s554
      $region40: #{tpu_custom_call.1} parent=35 // pred_fallthru
        _
    $region36: #{tpu_custom_call.1} parent=5 // pred_fallthru
      _
  $region6: #{tpu_custom_call.1} parent=0 // loop_footer
    %s12 = sadd.s32 1, %s8
  $region7: #{tpu_custom_call.1} parent=0 // loop_footer_branch
    %7 = sbr.rel target = $region3
  $region8: #{tpu_custom_call.1} parent=0 // loop_exit
    _

</llo_original>
